<compile_context>
chip_gen: v7x
topology: tpu7x:2x2x1
jax: 0.10.0
libtpu: 0.0.40
codegen_flags: <defaults>
</compile_context>

<pallas_src>
import functools

import jax
import jax.numpy as jnp
from jax import lax
from jax.experimental import pallas as pl
from jax.experimental.pallas import tpu as pltpu

_LANES = 128
_SUBLANES = 8
_STREAM_BLOCK_BYTES = 4 * 1024 * 1024   # per-buffer tile in the streaming path
_FUSED_MAX_BYTES = 12 * 1024 * 1024     # in + out <= 24 MiB VMEM on all generations
_VMEM_LIMIT_BYTES = 32 * 1024 * 1024
_PALLAS_MIN_ELEMS = 1 << 18             # below ~1 MiB, XLA's fused reduce+sub wins


# ---------------------------------------------------------------------------
# Kernels
# ---------------------------------------------------------------------------
def _fused_kernel(x_ref, o_ref, *, inv_size):
    """Whole (padded) X resident in VMEM: mean + subtract in one pass."""
    x = x_ref[...].astype(jnp.float32)
    mean = jnp.sum(x) * inv_size          # zero padding does not perturb the sum
    o_ref[...] = (x - mean).astype(o_ref.dtype)


def _partial_sum_kernel(x_ref, psum_ref, *, block_rows, blocks_per_split,
                        total_rows):
    """Pass 1: per-split partial sums of X into a resident (1, 8, 128) block.

    Every grid step is a pure-VPU vreg add (no cross-lane reduce, no
    loop-carried scalar).  Rows past `total_rows` (trailing partial block, or a
    duplicated clamped block when the split is uneven) are masked to zero.
    """
    c = pl.program_id(0)
    b = pl.program_id(1)

    @pl.when(b == 0)
    def _():
        psum_ref[...] = jnp.zeros_like(psum_ref)

    x = x_ref[...].astype(jnp.float32)
    rows_left = total_rows - (c * blocks_per_split + b) * block_rows
    row_ids = lax.broadcasted_iota(jnp.int32, x.shape, 0)
    x = jnp.where(row_ids < rows_left, x, 0.0)
    psum_ref[...] += jnp.sum(
        x.reshape(-1, _SUBLANES, _LANES), axis=0).reshape(1, _SUBLANES, _LANES)


def _subtract_kernel(mean_ref, x_ref, o_ref):
    """Pass 2: o = x - mean; mean is a (1, 1) f32 scalar held in SMEM."""
    mean = mean_ref[0, 0]
    o_ref[...] = (x_ref[...].astype(jnp.float32) - mean).astype(o_ref.dtype)


# ---------------------------------------------------------------------------
# Wrappers
# ---------------------------------------------------------------------------
def _centered_pallas(x, *, fused_max_bytes, block_bytes):
    orig_shape, orig_dtype = x.shape, x.dtype
    n = x.size
    inv_size = 1.0 / float(n)             # exact mean scaling for the true N
    itemsize = jnp.dtype(orig_dtype).itemsize

    # Lane-dense 2D view (rows, 128); pad only the sub-128 tail if ragged.
    n_rows = -(-n // _LANES)
    padded_n = n_rows * _LANES
    x_flat = x.reshape(-1)
    if padded_n != n:
        # TODO(synk): for large ragged inputs this pad (and the matching tail
        # slice below) still materializes one extra copy of X/Y; removing it
        # fully would need 1-D blocks with in-kernel tail masking.
        x_flat = jnp.pad(x_flat, (0, padded_n - n))
    x2d = x_flat.reshape(n_rows, _LANES)

    if padded_n * itemsize <= fused_max_bytes:
        # --- Fused single-pass path: X and Y resident in VMEM. ---
        y2d = pl.pallas_call(
            functools.partial(_fused_kernel, inv_size=inv_size),
            out_shape=jax.ShapeDtypeStruct((n_rows, _LANES), orig_dtype),
            in_specs=[pl.BlockSpec(memory_space=pltpu.MemorySpace.VMEM)],
            out_specs=pl.BlockSpec(memory_space=pltpu.MemorySpace.VMEM),
            compiler_params=pltpu.CompilerParams(
                vmem_limit_bytes=_VMEM_LIMIT_BYTES),
        )(x2d)
    else:
        # --- Streaming two-pass path. ---
        block_rows = max(block_bytes // (_LANES * itemsize), 32)
        block_rows = ((block_rows + 31) // 32) * 32   # sublane-pack safe for all dtypes
        num_blocks = -(-n_rows // block_rows)
        num_splits = 2 if num_blocks > 1 else 1       # megacore split (v7x: 2 TCs)
        blocks_per_split = -(-num_blocks // num_splits)
        last_block = num_blocks - 1

        def x_sum_map(c, b):
            # Clamp so a duplicated tail step never points fully out of bounds;
            # its contribution is masked to zero inside the kernel.
            return (jnp.minimum(c * blocks_per_split + b, last_block), 0)

        # Pass 1: per-split partial sums (each core reads its half of X once).
        partials = pl.pallas_call(
            functools.partial(
                _partial_sum_kernel,
                block_rows=block_rows,
                blocks_per_split=blocks_per_split,
                total_rows=n_rows),
            out_shape=jax.ShapeDtypeStruct(
                (num_splits, _SUBLANES, _LANES), jnp.float32),
            grid_spec=pltpu.PrefetchScalarGridSpec(
                num_scalar_prefetch=0,
                grid=(num_splits, blocks_per_split),
                in_specs=[pl.BlockSpec((block_rows, _LANES), x_sum_map)],
                out_specs=pl.BlockSpec(
                    (1, _SUBLANES, _LANES), lambda c, b: (c, 0, 0)),
            ),
            compiler_params=pltpu.CompilerParams(
                dimension_semantics=("parallel", "arbitrary"),
                vmem_limit_bytes=_VMEM_LIMIT_BYTES),
        )(x2d)

        # Tiny cross-split / cross-lane combine + 1/N scaling in XLA.
        mean = (jnp.sum(partials, dtype=jnp.float32) * inv_size).reshape(1, 1)

        # Pass 2: tiled, double-buffered, lane-dense elementwise subtract.
        y2d = pl.pallas_call(
            _subtract_kernel,
            out_shape=jax.ShapeDtypeStruct((n_rows, _LANES), orig_dtype),
            grid_spec=pltpu.PrefetchScalarGridSpec(
                num_scalar_prefetch=0,
                grid=(num_blocks,),
                in_specs=[
                    pl.BlockSpec(memory_space=pltpu.MemorySpace.SMEM),  # mean
                    pl.BlockSpec((block_rows, _LANES), lambda i: (i, 0)),
                ],
                out_specs=pl.BlockSpec((block_rows, _LANES), lambda i: (i, 0)),
            ),
            compiler_params=pltpu.CompilerParams(
                dimension_semantics=("parallel",),
                vmem_limit_bytes=_VMEM_LIMIT_BYTES),
        )(mean, x2d)

    y_flat = y2d.reshape(-1)
    if padded_n != n:
        y_flat = y_flat[:n]
    return y_flat.reshape(orig_shape)


def centered_layer(x: jax.Array, *, use_pallas=None,
                   fused_max_bytes=_FUSED_MAX_BYTES,
                   block_bytes=_STREAM_BLOCK_BYTES) -> jax.Array:
    """X - X.mean() over all elements (matches PyTorch CenteredLayer.forward)."""
    if x.size == 0:
        return x
    if use_pallas is None:
        use_pallas = x.size >= _PALLAS_MIN_ELEMS
    if not use_pallas:
        # Tiny tensors: launch overhead dominates; XLA's fused reduce+subtract
        # is already optimal.
        return x - jnp.mean(x)
    return _centered_pallas(x, fused_max_bytes=fused_max_bytes,
                            block_bytes=block_bytes)


if __name__ == "__main__":
    key = jax.random.PRNGKey(0)
    k1, k2, k3, k4 = jax.random.split(key, 4)

    # 1) Small NCHW activation (fused VMEM-resident path, n % 128 == 0).
    x = jax.random.normal(k1, (2, 4, 16, 16), dtype=jnp.float32)
    y = jax.block_until_ready(centered_layer(x, use_pallas=True))
    assert y.shape == x.shape and y.dtype == x.dtype
    assert jnp.allclose(y, x - jnp.mean(x), atol=1e-5, rtol=1e-5)
    assert abs(float(jnp.mean(y))) < 1e-4

    # 2) Ragged element count (fused path + sub-128 tail pad/slice).
    x2 = jax.random.normal(k2, (3, 5, 17, 19), dtype=jnp.float32)
    y2 = jax.block_until_ready(centered_layer(x2, use_pallas=True))
    assert y2.shape == x2.shape and y2.dtype == x2.dtype
    assert jnp.allclose(y2, x2 - jnp.mean(x2), atol=1e-5, rtol=1e-5)

    # 3) Force the streaming two-pass path (small blocks for test coverage):
    #    exercises the split-parallel reduction and the resident accumulator.
    x3 = jax.random.normal(k3, (8, 64, 256), dtype=jnp.float32)
    y3 = jax.block_until_ready(
        centered_layer(x3, use_pallas=True, fused_max_bytes=0,
                       block_bytes=64 * 1024))
    assert jnp.allclose(y3, x3 - jnp.mean(x3), atol=1e-5, rtol=1e-5)

    # 4) Streaming path with a ragged size: partial trailing block masking in
    #    pass 1, dropped out-of-bounds stores in pass 2, clamped duplicate block.
    x4 = jax.random.normal(k4, (100, 1037), dtype=jnp.float32)
    y4 = jax.block_until_ready(
        centered_layer(x4, use_pallas=True, fused_max_bytes=0,
                       block_bytes=64 * 1024))
    assert jnp.allclose(y4, x4 - jnp.mean(x4), atol=1e-5, rtol=1e-5)

    print("KERNEL_OK")
</pallas_src>

<mosaic_0001>
module attributes {stable_mosaic.version = 11 : i64} {
  func.func @_fused_kernel(%arg0: memref<16x128xf32, #tpu.memory_space<vmem>>, %arg1: memref<16x128xf32, #tpu.memory_space<vmem>>) attributes {dimension_semantics = [], scalar_prefetch = 0 : i64, scratch_operands = 0 : i64, tpu.core_type = #tpu.core_type<tc>} {
    %c0 = arith.constant 0 : index
    %c0_0 = arith.constant 0 : index
    %0 = vector.load %arg0[%c0, %c0_0] : memref<16x128xf32, #tpu.memory_space<vmem>>, vector<16x128xf32>
    %1 = vector.shape_cast %0 : vector<16x128xf32> to vector<1x16x128xf32>
    %cst = arith.constant dense<0.000000e+00> : vector<1xf32>
    %2 = vector.multi_reduction <add>, %1, %cst [1, 2] : vector<1x16x128xf32> to vector<1xf32>
    %3 = vector.shape_cast %2 : vector<1xf32> to vector<1x1x1xf32>
    %4 = vector.extract %3[0, 0, 0] : f32 from vector<1x1x1xf32>
    %cst_1 = arith.constant 4.8828125E-4 : f32
    %5 = arith.mulf %4, %cst_1 : f32
    %6 = vector.broadcast %5 : f32 to vector<16x128xf32>
    %7 = arith.subf %0, %6 : vector<16x128xf32>
    %c0_2 = arith.constant 0 : index
    %c0_3 = arith.constant 0 : index
    %8 = vector.load %arg1[%c0_2, %c0_3] : memref<16x128xf32, #tpu.memory_space<vmem>>, vector<16x128xf32>
    tpu.vector_store %arg1[%c0_2, %c0_3], %7 {strides = array<i32>} : memref<16x128xf32, #tpu.memory_space<vmem>>, vector<16x128xf32>,
    return
  }
}

</mosaic_0001>

<llo_original>
// kernel: tpu_custom_call.1
$region0: #{tpu_custom_call.1}
  #allocation0 [shape = 'u32[]', space=smem, size = 0x4, offset = 0x4, fixed_abs, tag = 'smem constant byte address 0x4 - core index']
  #allocation1 [shape = 'u32[144,128]{1,0:T(1,128)}', space=vmem, size = 0x12000, scoped, tag = 'internal scratch']
  %s0 = inlined_call_operand.hbm [shape: f32[16,128], index: 0, kind: input, shape index: {}]
  %s1 = inlined_call_operand.hbm [shape: f32[16,128], index: 1, kind: output, shape index: {}]
  %s2 = sld [smem:[#allocation0]]
  $region18: #{tpu_custom_call.1} parent=0
    _
  %s4 = ssub.s32 1, %s2
  %s5 = scalar_select 0, %s4, %s2
  $region1: #{tpu_custom_call.1} parent=0
    #allocation2 [shape = 'u8[8192]{0}', space=vmem, size = 0x2000, scoped, tag = 'input window, operand 0, single buffered']
    #allocation3 [shape = 's32[1]{0}', space=sflag, size = 0x4, scoped, tag = 'scoped memory for tpu_custom_call.1']
    #allocation4 [shape = 's32[1]{0}', space=sflag, size = 0x4, scoped, tag = 'scoped memory for tpu_custom_call.1']
    #allocation5 [shape = 'u8[8192]{0}', space=vmem, size = 0x2000, scoped, tag = 'output window, operand 0, single buffered']
    %6 = vsyncpa [#allocation3], 0
    %7 = vsyncpa [#allocation4], 0
    // Predicated region
    $region2: #{tpu_custom_call.1} parent=1 // pred_check
      _
    $region3: #{tpu_custom_call.1} parent=1 // pred_check_branch
      %9 = sbr.rel (0) target = $region5
    $region4: #{tpu_custom_call.1} parent=1 // pred_region
      %s11 = ssub.s32 256, 256
      %12 = vsyncadd [#allocation3], %s11
      %s13 = sshll.u32 [#allocation2], 4
      %s14 = int_to_ptr.vmem [resolvable:$true] %s13
      %19 = dma.hbm_to_vmem [thread:$0]  %s0, 256, %s14, [#allocation3], 128, 128, 8
    $region5: #{tpu_custom_call.1} parent=1 // pred_fallthru
      _
    // Predicated region
    $region6: #{tpu_custom_call.1} parent=1 // pred_check
      _
    $region7: #{tpu_custom_call.1} parent=1 // pred_check_branch
      %21 = sbr.rel (0) target = $region9
    $region8: #{tpu_custom_call.1} parent=1 // pred_region
      %22 = dma.done [#allocation3], 256
    $region9: #{tpu_custom_call.1} parent=1 // pred_fallthru
      _
    %v23 = vld [vmem:[#allocation2] sm:$0xff]
    %v24 = vld [vmem:[#allocation2 + $0x8] sm:$0xff]
    %v25 = vadd.f32 %v23, %v24
    %26 = vadd.xlane.f32.xlu0 %v25
    %v27 = vpop.xlane.xlu0 %26
    %v28 = vrot.slane %v27, 4
    %v29 = vadd.f32 %v27, %v28
    %v30 = vrot.slane %v29, 2
    %v31 = vadd.f32 %v29, %v30
    %v32 = vrot.slane %v31, 1
    %v33 = vadd.f32 %v31, %v32
    %s34 = vtos %v33
    %s35 = smul.f32 %s34, 0.00048828125
    %v36 = vstv %s35
    %v37 = vsub.f32 %v23, %v36
    %v38 = vsub.f32 %v24, %v36
    %39 = vst [vmem:[#allocation5] sm:$0xff] %v37
    %40 = vst [vmem:[#allocation5 + $0x8] sm:$0xff] %v38
    // Predicated region
    $region10: #{tpu_custom_call.1} parent=1 // pred_check
      _
    $region11: #{tpu_custom_call.1} parent=1 // pred_check_branch
      %42 = sbr.rel (0) target = $region13
    $region12: #{tpu_custom_call.1} parent=1 // pred_region
      %s44 = ssub.s32 256, 256
      %45 = vsyncadd [#allocation4], %s44
      %s46 = sshll.u32 [#allocation5], 4
      %s47 = int_to_ptr.vmem [resolvable:$true] %s46
      %52 = dma.vmem_to_hbm [thread:$0]  %s47, 256, %s1, [#allocation4], 128, 128, 8
    $region13: #{tpu_custom_call.1} parent=1 // pred_fallthru
      _
    // Predicated region
    $region14: #{tpu_custom_call.1} parent=1 // pred_check
      _
    $region15: #{tpu_custom_call.1} parent=1 // pred_check_branch
      %54 = sbr.rel (0) target = $region17
    $region16: #{tpu_custom_call.1} parent=1 // pred_region
      %55 = dma.done [#allocation4], 256
    $region17: #{tpu_custom_call.1} parent=1 // pred_fallthru
      _
    %56 = vsyncpa [#allocation3], 1
    %57 = vsyncpa [#allocation4], 1

</llo_original>
